<compile_context>
chip_gen: v6e
topology: v6e:2x2x1
jax: 0.10.0
libtpu: 0.0.40
codegen_flags: <defaults>
</compile_context>

<pallas_src>
import jax
import jax.numpy as jnp
from jax.experimental import pallas as pl
from jax.experimental.pallas import tpu as pltpu


def _broadcast_kernel(table_ref, out_ref):
    # table_ref: (1, TN)  -- lane chunk of the pre-gathered positional table
    # out_ref  : (TB, TN) -- TB batch slots of the corresponding output chunk
    out_ref[...] = jnp.broadcast_to(table_ref[...], out_ref.shape)


def _choose_blocks(batch, lanes, itemsize, budget_bytes=8 << 20):
    """Pick (TB, TN) block sizes for the (B, L*D) output.

    Budget accounting (per grid step, double-buffered pipeline):
        2 * TB * TN * itemsize   (output blocks)
      + 2 * TN * itemsize        (resident table block; conservatively counted
                                  double-buffered even though it never changes)
      <= budget_bytes
    The lane cap is budget/18 so that even the minimum TB of 8 (sublane
    constraint) stays within budget for very large rows.
    """
    lane_cap_bytes = budget_bytes // 18
    lane_cap = max(128, (lane_cap_bytes // itemsize // 128) * 128)

    tn = lanes if lanes <= lane_cap else int(lane_cap)
    tn_bytes = tn * itemsize

    avail = max(0, budget_bytes - 2 * tn_bytes)
    tb = max(1, avail // (2 * tn_bytes))
    if tb >= batch:
        tb = batch
    else:
        tb = max(8, (tb // 8) * 8)
        tb = min(tb, batch)

    # v7x has 2 TensorCores per chip: guarantee >= 2 batch grid steps when the
    # batch is large enough so the "parallel" axis can actually be sharded.
    if batch >= 16 and tb >= batch:
        tb = ((pl.cdiv(batch, 2) + 7) // 8) * 8
        tb = min(tb, batch)

    return int(tb), int(tn)


def learned_positional_encoding(x, embedding, pe, *, force_pallas=False):
    """x: (B, S) token ids (only B is used, like the PyTorch module).
       embedding: (max_seq_length, d_model) float32
       pe: (1, max_seq_length) int32
       returns (B, max_seq_length, d_model) float32
    """
    B = x.shape[0]
    L, D = embedding.shape
    itemsize = jnp.dtype(embedding.dtype).itemsize

    # Gather once, outside the kernel (exact nn.Embedding(pe) semantics for any pe).
    table = embedding[pe[0]]                      # (L, D)

    row_bytes = L * D * itemsize
    total_bytes = B * row_bytes

    # Fast path: a tiny output is pure launch overhead for Pallas; let XLA's
    # fused broadcast handle it.
    if not force_pallas and total_bytes < (1 << 20):
        return jnp.broadcast_to(table[None, :, :], (B, L, D))

    table_flat = table.reshape(1, L * D)          # lane-dense row

    TB, TN = _choose_blocks(B, L * D, itemsize)
    grid = (pl.cdiv(B, TB), pl.cdiv(L * D, TN))

    out_flat = pl.pallas_call(
        _broadcast_kernel,
        out_shape=jax.ShapeDtypeStruct((B, L * D), embedding.dtype),
        grid_spec=pltpu.PrefetchScalarGridSpec(
            num_scalar_prefetch=0,
            grid=grid,
            in_specs=[
                # Table: one lane chunk, constant across the batch axis.
                pl.BlockSpec((1, TN), lambda b, n: (0, n)),
            ],
            out_specs=pl.BlockSpec((TB, TN), lambda b, n: (b, n)),
        ),
        compiler_params=pltpu.CompilerParams(
            dimension_semantics=("parallel", "parallel"),
            vmem_limit_bytes=40 << 20),
        cost_estimate=pl.CostEstimate(
            flops=0,
            transcendentals=0,
            bytes_accessed=total_bytes + row_bytes),
    )(table_flat)

    return out_flat.reshape(B, L, D)


if __name__ == "__main__":
    # Module config (small, consistent with the forward pass)
    d_model = 32
    max_seq_length = 8
    batch = 2

    key = jax.random.PRNGKey(0)
    k_emb, k_x = jax.random.split(key)

    # nn.Embedding default init: N(0, 1)
    embedding = jax.random.normal(k_emb, (max_seq_length, d_model), dtype=jnp.float32)
    # registered buffer pe = arange(max_seq_length).unsqueeze(0)
    pe = jnp.arange(max_seq_length, dtype=jnp.int32)[None, :]    # (1, L)
    # x: batch of token-id sequences (only shape[0] matters)
    x = jax.random.randint(k_x, (batch, max_seq_length), 0, max_seq_length, dtype=jnp.int32)

    # reference: tile(embedding[pe], (B,1,1))
    ref = jnp.tile(embedding[pe[0]][None, ...], (batch, 1, 1))

    # Exercise the Pallas kernel (force past the small-size fast path).
    out = learned_positional_encoding(x, embedding, pe, force_pallas=True)
    out = jax.block_until_ready(out)
    assert out.shape == (batch, max_seq_length, d_model)
    assert jnp.allclose(out, ref, atol=1e-6), "pallas kernel mismatch vs reference"

    # Also check the no-kernel fast path (default behavior at this tiny shape).
    out_fast = jax.block_until_ready(learned_positional_encoding(x, embedding, pe))
    assert jnp.allclose(out_fast, ref, atol=1e-6), "fast path mismatch vs reference"

    print("KERNEL_OK")
</pallas_src>

<mosaic_0001>
module attributes {stable_mosaic.version = 11 : i64} {
  func.func @_broadcast_kernel(%arg0: i32, %arg1: i32, %arg2: memref<1x256xf32, #tpu.memory_space<vmem>>, %arg3: memref<2x256xf32, #tpu.memory_space<vmem>>) attributes {dimension_semantics = [#tpu.dimension_semantics<parallel>, #tpu.dimension_semantics<parallel>], iteration_bounds = array<i64: 1, 1>, scalar_prefetch = 0 : i64, scratch_operands = 0 : i64, tpu.core_type = #tpu.core_type<tc>, window_params = [{transform_indices = @transform_0, window_bounds = array<i64: 1, 256>}, {transform_indices = @transform_1, window_bounds = array<i64: 2, 256>}]} {
    %c0 = arith.constant 0 : index
    %c0_0 = arith.constant 0 : index
    %0 = vector.load %arg2[%c0, %c0_0] : memref<1x256xf32, #tpu.memory_space<vmem>>, vector<1x256xf32>
    %1 = vector.shape_cast %0 : vector<1x256xf32> to vector<1x256xf32>
    %2 = vector.broadcast %1 : vector<1x256xf32> to vector<2x256xf32>
    %c0_1 = arith.constant 0 : index
    %c0_2 = arith.constant 0 : index
    %3 = vector.load %arg3[%c0_1, %c0_2] : memref<2x256xf32, #tpu.memory_space<vmem>>, vector<2x256xf32>
    tpu.vector_store %arg3[%c0_1, %c0_2], %2 {strides = array<i32>} : memref<2x256xf32, #tpu.memory_space<vmem>>, vector<2x256xf32>,
    return
  }
  func.func @transform_0(%arg0: i32, %arg1: i32) -> (i32, i32) {
    %c0_i32 = arith.constant 0 : i32
    %c0_i32_0 = arith.constant 0 : i32
    return %c0_i32, %arg1 : i32, i32
  }
  func.func @transform_1(%arg0: i32, %arg1: i32) -> (i32, i32) {
    %c0_i32 = arith.constant 0 : i32
    return %arg0, %arg1 : i32, i32
  }
}

</mosaic_0001>

<llo_original>
// kernel: tpu_custom_call.1
$region0: #{tpu_custom_call.1}
  #allocation0 [shape = 'u32[]', space=smem, size = 0x4, offset = 0x4, fixed_abs, tag = 'smem constant byte address 0x4 - core index']
  #allocation1 [shape = 'u32[144,128]{1,0:T(1,128)}', space=vmem, size = 0x12000, scoped, tag = 'internal scratch']
  %s0 = inlined_call_operand.hbm [shape: f32[1,256], index: 0, kind: input, shape index: {}]
  %s1 = inlined_call_operand.hbm [shape: f32[2,256], index: 1, kind: output, shape index: {}]
  %s2 = sld [smem:[#allocation0]]
  $region18: #{tpu_custom_call.1} parent=0
    _
  %s4 = ssub.s32 1, %s2
  %s5 = scalar_select 0, %s4, %s2
  $region1: #{tpu_custom_call.1} parent=0
    #allocation2 [shape = 'u8[1024]{0}', space=vmem, size = 0x400, scoped, tag = 'input window, operand 0, single buffered']
    #allocation3 [shape = 's32[1]{0}', space=sflag, size = 0x4, scoped, tag = 'scoped memory for tpu_custom_call.1']
    #allocation4 [shape = 's32[1]{0}', space=sflag, size = 0x4, scoped, tag = 'scoped memory for tpu_custom_call.1']
    #allocation5 [shape = 'u8[2048]{0}', space=vmem, size = 0x800, scoped, tag = 'output window, operand 0, single buffered']
    %6 = vsyncpa [#allocation3], 0
    %7 = vsyncpa [#allocation4], 0
    // Predicated region
    $region2: #{tpu_custom_call.1} parent=1 // pred_check
      _
    $region3: #{tpu_custom_call.1} parent=1 // pred_check_branch
      %9 = sbr.rel (0) target = $region5
    $region4: #{tpu_custom_call.1} parent=1 // pred_region
      %s11 = ssub.s32 32, 32
      %12 = vsyncadd [#allocation3], %s11
      %s14 = sshll.u32 [#allocation2], 4
      %s15 = int_to_ptr.vmem [resolvable:$true] %s14
      %17 = dma.hbm_to_vmem [thread:$0]  %s0, 32, %s15, [#allocation3]
    $region5: #{tpu_custom_call.1} parent=1 // pred_fallthru
      _
    // Predicated region
    $region6: #{tpu_custom_call.1} parent=1 // pred_check
      _
    $region7: #{tpu_custom_call.1} parent=1 // pred_check_branch
      %19 = sbr.rel (0) target = $region9
    $region8: #{tpu_custom_call.1} parent=1 // pred_region
      %20 = dma.done [#allocation3], 32
    $region9: #{tpu_custom_call.1} parent=1 // pred_fallthru
      _
    %v21 = vld [vmem:[#allocation2] sm:$0x3]
    %v23 = vlaneseq
    %v24 = vshrl.u32 %v23, 7
    %v25 = vsub.s32 0, %v24
    %v26 = vrot.slane %v21, %v25
    %v27 = vlaneseq
    %v28 = vshrl.u32 %v27, 7
    %v29 = vsub.s32 1, %v28
    %v30 = vrot.slane %v21, %v29
    %v31 = vcombine.low %v26, %v30
    %v33 = vunpack.c.l.s4 1983009808
    %v34 = vunpack.c.0.s8 %v33
    %v35 = vlaneseq
    %v36 = vshrl.u32 %v35, 7
    %v37 = vsub.s32 %v34, %v36
    %v38 = vrot.slane %v31, %v37
    %40 = vst [vmem:[#allocation5] sm:$0xf] %v38
    // Predicated region
    $region10: #{tpu_custom_call.1} parent=1 // pred_check
      _
    $region11: #{tpu_custom_call.1} parent=1 // pred_check_branch
      %42 = sbr.rel (0) target = $region13
    $region12: #{tpu_custom_call.1} parent=1 // pred_region
      %s44 = ssub.s32 64, 64
      %45 = vsyncadd [#allocation4], %s44
      %s47 = sshll.u32 [#allocation5], 4
      %s48 = int_to_ptr.vmem [resolvable:$true] %s47
      %50 = dma.vmem_to_hbm [thread:$0]  %s48, 64, %s1, [#allocation4]
    $region13: #{tpu_custom_call.1} parent=1 // pred_fallthru
      _
    // Predicated region
    $region14: #{tpu_custom_call.1} parent=1 // pred_check
      _
    $region15: #{tpu_custom_call.1} parent=1 // pred_check_branch
      %52 = sbr.rel (0) target = $region17
    $region16: #{tpu_custom_call.1} parent=1 // pred_region
      %53 = dma.done [#allocation4], 64
    $region17: #{tpu_custom_call.1} parent=1 // pred_fallthru
      _
    %54 = vsyncpa [#allocation3], 1
    %55 = vsyncpa [#allocation4], 1

</llo_original>
